<compile_context>
chip_gen: v7x
topology: tpu7x:2x2x1
jax: 0.10.0
libtpu: 0.0.40
codegen_flags: <defaults>
</compile_context>

<pallas_src>
import numpy as np
import jax
import jax.numpy as jnp
from jax.experimental import pallas as pl
from jax.experimental.pallas import tpu as pltpu

H = W = 5                      # spatial size forced by Linear((10+8)*5*5, ...)
P = H * W                      # 25 positions
C_GRID = 1                     # grid-part channels
C_BLIND = 8                    # blind-part channels  -> in_channels = 9
C_HID = 10                     # conv hidden channels
LANE = 128

IN_G_PAD = 128                 # 25 grid-input features padded to 128 lanes
IN_B_PAD = 256                 # 200 blind features padded to 256 lanes
HID_PAD = 256                  # 250 hidden features padded to 256 lanes
IN_PACK = IN_G_PAD + IN_B_PAD  # 384-wide packed activation slab
FC_K = HID_PAD + IN_B_PAD      # 512 fused FC contraction dim


def _round_up(x, m):
    return (x + m - 1) // m * m


# ----------------------------------------------------------------------------
# Pallas kernel: per batch tile, the whole net is 5 lane-dense MXU matmuls.
# ----------------------------------------------------------------------------
def dqn_kernel(x_ref,
               w1a_ref, b1a_ref, w1b_ref, b1b_ref,
               w2a_ref, b2a_ref, w2b_ref, b2b_ref,
               wfc_ref, bfc_ref, out_ref):
    def dense_relu(a, w_ref, b_ref):
        y = jnp.dot(a, w_ref[...], preferred_element_type=jnp.float32)
        return jnp.maximum(y + b_ref[...], 0.0).astype(jnp.bfloat16)

    x = x_ref[...]                      # (TB, 384) bf16
    xg = x[:, :IN_G_PAD]                # grid channel, position-major, padded
    xb = x[:, IN_G_PAD:]                # blind part, natural NCHW order, padded

    h = dense_relu(xg, w1a_ref, b1a_ref)    # conv_block1[0]
    h = dense_relu(h, w1b_ref, b1b_ref)     # conv_block1[1]
    h = dense_relu(h, w2a_ref, b2a_ref)     # conv_block2[0]
    h = dense_relu(h, w2b_ref, b2b_ref)     # conv_block2[1]

    hx = jnp.concatenate([h, xb], axis=1)   # (TB, 512) bf16, lane-aligned halves
    out = jnp.dot(hx, wfc_ref[...], preferred_element_type=jnp.float32)
    out_ref[...] = out + bfc_ref[...]


# ----------------------------------------------------------------------------
# Host-side weight folding (one-time, batch-independent, tiny constants).
# ----------------------------------------------------------------------------
def _conv_dense(w_oihw, b):
    """Fold a 3x3 'same' conv on a 5x5 grid into a padded dense matmul weight.

    Activation layout: feature index = position*Cin + channel (position-major).
    Returns bf16 (pad(25*Cin), pad(25*Cout)) weight and f32 (1, pad) bias.
    """
    w = np.asarray(w_oihw, np.float32)               # (Cout, Cin, 3, 3)
    cout, cin = w.shape[0], w.shape[1]
    fi, fo = P * cin, P * cout
    wd = np.zeros((fi, fo), np.float32)
    for ho in range(H):
        for wo in range(W):
            po = ho * W + wo
            for dy in range(3):
                for dx in range(3):
                    hi, wi = ho + dy - 1, wo + dx - 1
                    if 0 <= hi < H and 0 <= wi < W:
                        pi = hi * W + wi
                        wd[pi * cin:(pi + 1) * cin,
                           po * cout:(po + 1) * cout] = w[:, :, dy, dx].T
    bd = np.tile(np.asarray(b, np.float32), P)       # bd[p*Cout + c] = b[c]
    fi_p, fo_p = _round_up(fi, LANE), _round_up(fo, LANE)
    wd_p = np.zeros((fi_p, fo_p), np.float32); wd_p[:fi, :fo] = wd
    bd_p = np.zeros((1, fo_p), np.float32); bd_p[0, :fo] = bd
    return jnp.asarray(wd_p, jnp.bfloat16), jnp.asarray(bd_p, jnp.float32)


def _fc_dense(wfc, bfc):
    """Build ONE fused FC weight matching the in-kernel concat([h, xb]) layout.

    Rows [0, 256)  : grid-feature half, permuted to position-major (p*10 + c).
    Rows [256, 512): blind half in natural NCHW flatten order (c*25 + p), so
                     the runtime input needs NO permutation.
    """
    w = np.asarray(wfc, np.float32)                  # (A, 450), NCHW-flatten
    a = w.shape[0]
    wg = (w[:, :C_HID * P].reshape(a, C_HID, P)
          .transpose(2, 1, 0).reshape(P * C_HID, a))     # row = p*10 + c
    wb = w[:, C_HID * P:].T                               # row = c*25 + p
    a_p = _round_up(a, LANE)
    wfused = np.zeros((FC_K, a_p), np.float32)
    wfused[:P * C_HID, :a] = wg
    wfused[HID_PAD:HID_PAD + P * C_BLIND, :a] = wb
    b_p = np.zeros((1, a_p), np.float32)
    b_p[0, :a] = np.asarray(bfc, np.float32)
    return jnp.asarray(wfused, jnp.bfloat16), jnp.asarray(b_p, jnp.float32)


def prepare_params(params):
    w1a, b1a = _conv_dense(params["w1a"], params["b1a"])
    w1b, b1b = _conv_dense(params["w1b"], params["b1b"])
    w2a, b2a = _conv_dense(params["w2a"], params["b2a"])
    w2b, b2b = _conv_dense(params["w2b"], params["b2b"])
    wfc, bfc = _fc_dense(params["wfc"], params["bfc"])
    return dict(w1a=w1a, b1a=b1a, w1b=w1b, b1b=b1b,
                w2a=w2a, b2a=b2a, w2b=w2b, b2b=b2b,
                wfc=wfc, bfc=bfc)


# ----------------------------------------------------------------------------
# Forward wrapper: input packing + batch-tiled pallas_call.
# ----------------------------------------------------------------------------
def dqn_forward_pallas(x_nchw, dense, out_actions):
    n = x_nchw.shape[0]
    a_pad = dense["bfc"].shape[1]       # 128 (out_actions padded)

    # Batch tile: big enough to amortize per-step overhead, but always >= 2
    # grid blocks once n > 8 so v7x can shard the parallel axis across 2 TCs.
    if n <= 8:
        tb = 8
    else:
        tb = min(1024, _round_up((n + 1) // 2, 8))
    n_pad = _round_up(n, tb)
    n_blocks = n_pad // tb

    # Pack inputs into a single bf16 slab: [:, :128] grid channel (h*5+w),
    # [:, 128:384] blind part in natural NCHW flatten order (c*25+p).
    xg = x_nchw[:, 0, :, :].reshape(n, P).astype(jnp.bfloat16)
    xb = x_nchw[:, C_GRID:, :, :].reshape(n, P * C_BLIND).astype(jnp.bfloat16)
    xg = jnp.pad(xg, ((0, n_pad - n), (0, IN_G_PAD - P)))
    xb = jnp.pad(xb, ((0, n_pad - n), (0, IN_B_PAD - P * C_BLIND)))
    x_packed = jnp.concatenate([xg, xb], axis=1)          # (n_pad, 384)

    w_args = (dense["w1a"], dense["b1a"], dense["w1b"], dense["b1b"],
              dense["w2a"], dense["b2a"], dense["w2b"], dense["b2b"],
              dense["wfc"], dense["bfc"])

    def full_spec(arr):
        return pl.BlockSpec(arr.shape, lambda i: (0, 0))

    flops = 2 * n_pad * (IN_G_PAD * HID_PAD + 3 * HID_PAD * HID_PAD
                         + FC_K * a_pad)
    bytes_accessed = (2 * n_pad * IN_PACK + 4 * n_pad * a_pad
                      + sum(int(np.prod(w.shape)) * w.dtype.itemsize
                            for w in w_args))

    out = pl.pallas_call(
        dqn_kernel,
        out_shape=jax.ShapeDtypeStruct((n_pad, a_pad), jnp.float32),
        grid=(n_blocks,),
        in_specs=[pl.BlockSpec((tb, IN_PACK), lambda i: (i, 0))]
                 + [full_spec(w) for w in w_args],
        out_specs=pl.BlockSpec((tb, a_pad), lambda i: (i, 0)),
        compiler_params=pltpu.CompilerParams(
            dimension_semantics=("parallel",),
            vmem_limit_bytes=32 * 1024 * 1024),
        cost_estimate=pl.CostEstimate(flops=flops, transcendentals=0,
                                      bytes_accessed=bytes_accessed),
    )(x_packed, *w_args)
    return out[:n, :out_actions]


# ----------------------------------------------------------------------------
# Pure-JAX reference (mirrors the PyTorch module exactly) for validation.
# ----------------------------------------------------------------------------
def dqn_forward_ref(x_nchw, params):
    def conv(x, w, b):
        y = jax.lax.conv_general_dilated(
            x, w, window_strides=(1, 1), padding=((1, 1), (1, 1)),
            dimension_numbers=("NCHW", "OIHW", "NCHW"))
        return jax.nn.relu(y + b[None, :, None, None])

    g = x_nchw[:, :1]
    bl = x_nchw[:, 1:]
    g = conv(g, params["w1a"], params["b1a"])
    g = conv(g, params["w1b"], params["b1b"])
    g = conv(g, params["w2a"], params["b2a"])
    g = conv(g, params["w2b"], params["b2b"])
    comb = jnp.concatenate([g, bl], axis=1)          # (N, 18, 5, 5)
    flat = comb.reshape(comb.shape[0], -1)           # NCHW flatten
    return flat @ params["wfc"].T + params["bfc"]


def make_params(key, out_actions):
    ks = jax.random.split(key, 10)
    r = lambda k, s: 0.1 * jax.random.normal(k, s, jnp.float32)
    return {
        "w1a": r(ks[0], (C_HID, C_GRID, 3, 3)), "b1a": r(ks[1], (C_HID,)),
        "w1b": r(ks[2], (C_HID, C_HID, 3, 3)), "b1b": r(ks[3], (C_HID,)),
        "w2a": r(ks[4], (C_HID, C_HID, 3, 3)), "b2a": r(ks[5], (C_HID,)),
        "w2b": r(ks[6], (C_HID, C_HID, 3, 3)), "b2b": r(ks[7], (C_HID,)),
        "wfc": r(ks[8], (out_actions, (C_HID + C_BLIND) * P)),
        "bfc": r(ks[9], (out_actions,)),
    }


if __name__ == "__main__":
    key = jax.random.PRNGKey(0)
    k_x, k_p = jax.random.split(key)
    batch, out_actions = 2, 4
    x = jax.random.normal(k_x, (batch, C_GRID + C_BLIND, H, W), jnp.float32)
    params = make_params(k_p, out_actions)

    dense = prepare_params(params)           # one-time, batch-independent
    out = dqn_forward_pallas(x, dense, out_actions)
    out = jax.block_until_ready(out)

    ref = dqn_forward_ref(x, params)
    assert out.shape == (batch, out_actions)
    # bf16 weights/activations with f32 accumulation -> slightly looser check.
    assert np.allclose(np.asarray(out), np.asarray(ref), rtol=3e-2, atol=3e-2), (
        "Pallas kernel output does not match reference")
    print("KERNEL_OK")
</pallas_src>

<mosaic_0001>
module attributes {stable_mosaic.version = 11 : i64} {
  func.func @dqn_kernel(%arg0: i32, %arg1: memref<8x384xbf16, #tpu.memory_space<vmem>>, %arg2: memref<128x256xbf16, #tpu.memory_space<vmem>>, %arg3: memref<1x256xf32, #tpu.memory_space<vmem>>, %arg4: memref<256x256xbf16, #tpu.memory_space<vmem>>, %arg5: memref<1x256xf32, #tpu.memory_space<vmem>>, %arg6: memref<256x256xbf16, #tpu.memory_space<vmem>>, %arg7: memref<1x256xf32, #tpu.memory_space<vmem>>, %arg8: memref<256x256xbf16, #tpu.memory_space<vmem>>, %arg9: memref<1x256xf32, #tpu.memory_space<vmem>>, %arg10: memref<512x128xbf16, #tpu.memory_space<vmem>>, %arg11: memref<1x128xf32, #tpu.memory_space<vmem>>, %arg12: memref<8x128xf32, #tpu.memory_space<vmem>>) attributes {dimension_semantics = [#tpu.dimension_semantics<parallel>], iteration_bounds = array<i64: 1>, scalar_prefetch = 0 : i64, scratch_operands = 0 : i64, tpu.core_type = #tpu.core_type<tc>, window_params = [{transform_indices = @transform_0, window_bounds = array<i64: 8, 384>}, {pipeline_mode = #tpu.pipeline_mode<synchronous>, transform_indices = @transform_1, window_bounds = array<i64: 128, 256>}, {pipeline_mode = #tpu.pipeline_mode<synchronous>, transform_indices = @transform_2, window_bounds = array<i64: 1, 256>}, {pipeline_mode = #tpu.pipeline_mode<synchronous>, transform_indices = @transform_3, window_bounds = array<i64: 256, 256>}, {pipeline_mode = #tpu.pipeline_mode<synchronous>, transform_indices = @transform_4, window_bounds = array<i64: 1, 256>}, {pipeline_mode = #tpu.pipeline_mode<synchronous>, transform_indices = @transform_5, window_bounds = array<i64: 256, 256>}, {pipeline_mode = #tpu.pipeline_mode<synchronous>, transform_indices = @transform_6, window_bounds = array<i64: 1, 256>}, {pipeline_mode = #tpu.pipeline_mode<synchronous>, transform_indices = @transform_7, window_bounds = array<i64: 256, 256>}, {pipeline_mode = #tpu.pipeline_mode<synchronous>, transform_indices = @transform_8, window_bounds = array<i64: 1, 256>}, {pipeline_mode = #tpu.pipeline_mode<synchronous>, transform_indices = @transform_9, window_bounds = array<i64: 512, 128>}, {pipeline_mode = #tpu.pipeline_mode<synchronous>, transform_indices = @transform_10, window_bounds = array<i64: 1, 128>}, {transform_indices = @transform_11, window_bounds = array<i64: 8, 128>}]} {
    %c0 = arith.constant 0 : index
    %c0_0 = arith.constant 0 : index
    %0 = vector.load %arg1[%c0, %c0_0] : memref<8x384xbf16, #tpu.memory_space<vmem>>, vector<8x384xbf16>
    %1 = vector.extract_strided_slice %0 {offsets = [0, 0], sizes = [8, 128], strides = [1, 1]} : vector<8x384xbf16> to vector<8x128xbf16>
    %2 = vector.extract_strided_slice %0 {offsets = [0, 128], sizes = [8, 256], strides = [1, 1]} : vector<8x384xbf16> to vector<8x256xbf16>
    %c0_1 = arith.constant 0 : index
    %c0_2 = arith.constant 0 : index
    %3 = vector.load %arg2[%c0_1, %c0_2] : memref<128x256xbf16, #tpu.memory_space<vmem>>, vector<128x256xbf16>
    %cst = arith.constant dense<0.000000e+00> : vector<8x256xf32>
    %4 = tpu.matmul %1, %3, %cst {dimension_numbers = #tpu.dot_dimension_numbers<[1], [0], [0], [1], [0, 0, 1, 1], [], []>} : vector<8x128xbf16>, vector<128x256xbf16>, vector<8x256xf32> -> vector<8x256xf32>
    %c0_3 = arith.constant 0 : index
    %c0_4 = arith.constant 0 : index
    %5 = vector.load %arg3[%c0_3, %c0_4] : memref<1x256xf32, #tpu.memory_space<vmem>>, vector<1x256xf32>
    %6 = vector.broadcast %5 : vector<1x256xf32> to vector<8x256xf32>
    %7 = arith.addf %4, %6 : vector<8x256xf32>
    %cst_5 = arith.constant 0.000000e+00 : f32
    %8 = vector.broadcast %cst_5 : f32 to vector<8x256xf32>
    %9 = arith.maximumf %7, %8 : vector<8x256xf32>
    %10 = arith.truncf %9 : vector<8x256xf32> to vector<8x256xbf16>
    %c0_6 = arith.constant 0 : index
    %c0_7 = arith.constant 0 : index
    %11 = vector.load %arg4[%c0_6, %c0_7] : memref<256x256xbf16, #tpu.memory_space<vmem>>, vector<256x256xbf16>
    %cst_8 = arith.constant dense<0.000000e+00> : vector<8x256xf32>
    %12 = tpu.matmul %10, %11, %cst_8 {dimension_numbers = #tpu.dot_dimension_numbers<[1], [0], [0], [1], [0, 0, 1, 1], [], []>} : vector<8x256xbf16>, vector<256x256xbf16>, vector<8x256xf32> -> vector<8x256xf32>
    %c0_9 = arith.constant 0 : index
    %c0_10 = arith.constant 0 : index
    %13 = vector.load %arg5[%c0_9, %c0_10] : memref<1x256xf32, #tpu.memory_space<vmem>>, vector<1x256xf32>
    %14 = vector.broadcast %13 : vector<1x256xf32> to vector<8x256xf32>
    %15 = arith.addf %12, %14 : vector<8x256xf32>
    %cst_11 = arith.constant 0.000000e+00 : f32
    %16 = vector.broadcast %cst_11 : f32 to vector<8x256xf32>
    %17 = arith.maximumf %15, %16 : vector<8x256xf32>
    %18 = arith.truncf %17 : vector<8x256xf32> to vector<8x256xbf16>
    %c0_12 = arith.constant 0 : index
    %c0_13 = arith.constant 0 : index
    %19 = vector.load %arg6[%c0_12, %c0_13] : memref<256x256xbf16, #tpu.memory_space<vmem>>, vector<256x256xbf16>
    %cst_14 = arith.constant dense<0.000000e+00> : vector<8x256xf32>
    %20 = tpu.matmul %18, %19, %cst_14 {dimension_numbers = #tpu.dot_dimension_numbers<[1], [0], [0], [1], [0, 0, 1, 1], [], []>} : vector<8x256xbf16>, vector<256x256xbf16>, vector<8x256xf32> -> vector<8x256xf32>
    %c0_15 = arith.constant 0 : index
    %c0_16 = arith.constant 0 : index
    %21 = vector.load %arg7[%c0_15, %c0_16] : memref<1x256xf32, #tpu.memory_space<vmem>>, vector<1x256xf32>
    %22 = vector.broadcast %21 : vector<1x256xf32> to vector<8x256xf32>
    %23 = arith.addf %20, %22 : vector<8x256xf32>
    %cst_17 = arith.constant 0.000000e+00 : f32
    %24 = vector.broadcast %cst_17 : f32 to vector<8x256xf32>
    %25 = arith.maximumf %23, %24 : vector<8x256xf32>
    %26 = arith.truncf %25 : vector<8x256xf32> to vector<8x256xbf16>
    %c0_18 = arith.constant 0 : index
    %c0_19 = arith.constant 0 : index
    %27 = vector.load %arg8[%c0_18, %c0_19] : memref<256x256xbf16, #tpu.memory_space<vmem>>, vector<256x256xbf16>
    %cst_20 = arith.constant dense<0.000000e+00> : vector<8x256xf32>
    %28 = tpu.matmul %26, %27, %cst_20 {dimension_numbers = #tpu.dot_dimension_numbers<[1], [0], [0], [1], [0, 0, 1, 1], [], []>} : vector<8x256xbf16>, vector<256x256xbf16>, vector<8x256xf32> -> vector<8x256xf32>
    %c0_21 = arith.constant 0 : index
    %c0_22 = arith.constant 0 : index
    %29 = vector.load %arg9[%c0_21, %c0_22] : memref<1x256xf32, #tpu.memory_space<vmem>>, vector<1x256xf32>
    %30 = vector.broadcast %29 : vector<1x256xf32> to vector<8x256xf32>
    %31 = arith.addf %28, %30 : vector<8x256xf32>
    %cst_23 = arith.constant 0.000000e+00 : f32
    %32 = vector.broadcast %cst_23 : f32 to vector<8x256xf32>
    %33 = arith.maximumf %31, %32 : vector<8x256xf32>
    %34 = arith.truncf %33 : vector<8x256xf32> to vector<8x256xbf16>
    %35 = tpu.concatenate %34, %2 in 1 : vector<8x256xbf16>, vector<8x256xbf16> -> vector<8x512xbf16>
    %c0_24 = arith.constant 0 : index
    %c0_25 = arith.constant 0 : index
    %36 = vector.load %arg10[%c0_24, %c0_25] : memref<512x128xbf16, #tpu.memory_space<vmem>>, vector<512x128xbf16>
    %cst_26 = arith.constant dense<0.000000e+00> : vector<8x128xf32>
    %37 = tpu.matmul %35, %36, %cst_26 {dimension_numbers = #tpu.dot_dimension_numbers<[1], [0], [0], [1], [0, 0, 1, 1], [], []>} : vector<8x512xbf16>, vector<512x128xbf16>, vector<8x128xf32> -> vector<8x128xf32>
    %c0_27 = arith.constant 0 : index
    %c0_28 = arith.constant 0 : index
    %38 = vector.load %arg11[%c0_27, %c0_28] : memref<1x128xf32, #tpu.memory_space<vmem>>, vector<1x128xf32>
    %39 = vector.broadcast %38 : vector<1x128xf32> to vector<8x128xf32>
    %40 = arith.addf %37, %39 : vector<8x128xf32>
    %c0_29 = arith.constant 0 : index
    %c0_30 = arith.constant 0 : index
    %41 = vector.load %arg12[%c0_29, %c0_30] : memref<8x128xf32, #tpu.memory_space<vmem>>, vector<8x128xf32>
    tpu.vector_store %arg12[%c0_29, %c0_30], %40 {strides = array<i32>} : memref<8x128xf32, #tpu.memory_space<vmem>>, vector<8x128xf32>,
    return
  }
  func.func @transform_0(%arg0: i32) -> (i32, i32) {
    %c0_i32 = arith.constant 0 : i32
    %c0_i32_0 = arith.constant 0 : i32
    return %arg0, %c0_i32 : i32, i32
  }
  func.func @transform_1(%arg0: i32) -> (i32, i32) {
    %c0_i32 = arith.constant 0 : i32
    %c0_i32_0 = arith.constant 0 : i32
    %c0_i32_1 = arith.constant 0 : i32
    return %c0_i32, %c0_i32_0 : i32, i32
  }
  func.func @transform_2(%arg0: i32) -> (i32, i32) {
    %c0_i32 = arith.constant 0 : i32
    %c0_i32_0 = arith.constant 0 : i32
    %c0_i32_1 = arith.constant 0 : i32
    return %c0_i32, %c0_i32_0 : i32, i32
  }
  func.func @transform_3(%arg0: i32) -> (i32, i32) {
    %c0_i32 = arith.constant 0 : i32
    %c0_i32_0 = arith.constant 0 : i32
    %c0_i32_1 = arith.constant 0 : i32
    return %c0_i32, %c0_i32_0 : i32, i32
  }
  func.func @transform_4(%arg0: i32) -> (i32, i32) {
    %c0_i32 = arith.constant 0 : i32
    %c0_i32_0 = arith.constant 0 : i32
    %c0_i32_1 = arith.constant 0 : i32
    return %c0_i32, %c0_i32_0 : i32, i32
  }
  func.func @transform_5(%arg0: i32) -> (i32, i32) {
    %c0_i32 = arith.constant 0 : i32
    %c0_i32_0 = arith.constant 0 : i32
    %c0_i32_1 = arith.constant 0 : i32
    return %c0_i32, %c0_i32_0 : i32, i32
  }
  func.func @transform_6(%arg0: i32) -> (i32, i32) {
    %c0_i32 = arith.constant 0 : i32
    %c0_i32_0 = arith.constant 0 : i32
    %c0_i32_1 = arith.constant 0 : i32
    return %c0_i32, %c0_i32_0 : i32, i32
  }
  func.func @transform_7(%arg0: i32) -> (i32, i32) {
    %c0_i32 = arith.constant 0 : i32
    %c0_i32_0 = arith.constant 0 : i32
    %c0_i32_1 = arith.constant 0 : i32
    return %c0_i32, %c0_i32_0 : i32, i32
  }
  func.func @transform_8(%arg0: i32) -> (i32, i32) {
    %c0_i32 = arith.constant 0 : i32
    %c0_i32_0 = arith.constant 0 : i32
    %c0_i32_1 = arith.constant 0 : i32
    return %c0_i32, %c0_i32_0 : i32, i32
  }
  func.func @transform_9(%arg0: i32) -> (i32, i32) {
    %c0_i32 = arith.constant 0 : i32
    %c0_i32_0 = arith.constant 0 : i32
    %c0_i32_1 = arith.constant 0 : i32
    return %c0_i32, %c0_i32_0 : i32, i32
  }
  func.func @transform_10(%arg0: i32) -> (i32, i32) {
    %c0_i32 = arith.constant 0 : i32
    %c0_i32_0 = arith.constant 0 : i32
    %c0_i32_1 = arith.constant 0 : i32
    return %c0_i32, %c0_i32_0 : i32, i32
  }
  func.func @transform_11(%arg0: i32) -> (i32, i32) {
    %c0_i32 = arith.constant 0 : i32
    %c0_i32_0 = arith.constant 0 : i32
    return %arg0, %c0_i32 : i32, i32
  }
}

</mosaic_0001>

<llo_original>
// kernel: tpu_custom_call.1
$region0: #{tpu_custom_call.1}
  #allocation0 [shape = 'u32[]', space=smem, size = 0x4, offset = 0x4, fixed_abs, tag = 'smem constant byte address 0x4 - core index']
  #allocation1 [shape = 'u32[144,128]{1,0:T(1,128)}', space=vmem, size = 0x12000, scoped, tag = 'internal scratch']
  %s0 = inlined_call_operand.hbm [shape: bf16[8,384], index: 0, kind: input, shape index: {}]
  %s1 = inlined_call_operand.hbm [shape: bf16[128,256], index: 1, kind: input, shape index: {}]
  %s2 = inlined_call_operand.vmem [shape: f32[1,256], index: 2, kind: input, shape index: {}]
  %s3 = inlined_call_operand.hbm [shape: bf16[256,256], index: 3, kind: input, shape index: {}]
  %s4 = inlined_call_operand.vmem [shape: f32[1,256], index: 4, kind: input, shape index: {}]
  %s5 = inlined_call_operand.hbm [shape: bf16[256,256], index: 5, kind: input, shape index: {}]
  %s6 = inlined_call_operand.vmem [shape: f32[1,256], index: 6, kind: input, shape index: {}]
  %s7 = inlined_call_operand.hbm [shape: bf16[256,256], index: 7, kind: input, shape index: {}]
  %s8 = inlined_call_operand.vmem [shape: f32[1,256], index: 8, kind: input, shape index: {}]
  %s9 = inlined_call_operand.hbm [shape: bf16[512,128], index: 9, kind: input, shape index: {}]
  %s10 = inlined_call_operand.vmem [shape: f32[1,128], index: 10, kind: input, shape index: {}]
  %s11 = inlined_call_operand.hbm [shape: f32[8,128], index: 11, kind: output, shape index: {}]
  %s12 = sld [smem:[#allocation0]]
  $region78: #{tpu_custom_call.1} parent=0
    _
  %s14 = ssub.s32 1, %s12
  %s15 = scalar_select 0, %s14, %s12
  $region1: #{tpu_custom_call.1} parent=0
    #allocation2 [shape = 'u8[6144]{0}', space=vmem, size = 0x1800, scoped, tag = 'input window, operand 0, single buffered']
    #allocation3 [shape = 's32[1]{0}', space=sflag, size = 0x4, scoped, tag = 'scoped memory for tpu_custom_call.1']
    #allocation4 [shape = 's32[1]{0}', space=sflag, size = 0x4, scoped, tag = 'scoped memory for tpu_custom_call.1']
    #allocation5 [shape = 'u8[65536]{0}', space=vmem, size = 0x10000, scoped, tag = 'input window, operand 1, single buffered']
    #allocation6 [shape = 's32[1]{0}', space=sflag, size = 0x4, scoped, tag = 'scoped memory for tpu_custom_call.1']
    #allocation7 [shape = 'u8[131072]{0}', space=vmem, size = 0x20000, scoped, tag = 'input window, operand 3, single buffered']
    #allocation8 [shape = 'u8[131072]{0}', space=vmem, size = 0x20000, scoped, tag = 'input window, operand 5, single buffered']
    #allocation9 [shape = 's32[1]{0}', space=sflag, size = 0x4, scoped, tag = 'scoped memory for tpu_custom_call.1']
    #allocation10 [shape = 'u8[131072]{0}', space=vmem, size = 0x20000, scoped, tag = 'input window, operand 7, single buffered']
    #allocation11 [shape = 'u8[131072]{0}', space=vmem, size = 0x20000, scoped, tag = 'input window, operand 9, single buffered']
    #allocation12 [shape = 's32[1]{0}', space=sflag, size = 0x4, scoped, tag = 'scoped memory for tpu_custom_call.1']
    #allocation13 [shape = 'u8[4096]{0}', space=vmem, size = 0x1000, scoped, tag = 'output window, operand 0, single buffered']
    %16 = vsyncpa [#allocation3], 0
    %17 = vsyncpa [#allocation6], 0
    %18 = vsyncpa [#allocation9], 0
    %19 = vsyncpa [#allocation12], 0
    %20 = vsyncpa [#allocation4], 0
    // Predicated region
    $region2: #{tpu_custom_call.1} parent=1 // pred_check
      _
    $region3: #{tpu_custom_call.1} parent=1 // pred_check_branch
      %22 = sbr.rel (0) target = $region5
    $region4: #{tpu_custom_call.1} parent=1 // pred_region
      %s24 = ssub.s32 192, 192
      %25 = vsyncadd [#allocation3], %s24
      %s27 = sshll.u32 [#allocation2], 4
      %s28 = int_to_ptr.vmem [resolvable:$true] %s27
      %30 = dma.hbm_to_vmem [thread:$0]  %s0, 192, %s28, [#allocation3]
    $region5: #{tpu_custom_call.1} parent=1 // pred_fallthru
      _
    // Predicated region
    $region6: #{tpu_custom_call.1} parent=1 // pred_check
      _
    $region7: #{tpu_custom_call.1} parent=1 // pred_check_branch
      %32 = sbr.rel (0) target = $region9
    $region8: #{tpu_custom_call.1} parent=1 // pred_region
      %s34 = ssub.s32 2048, 2048
      %35 = vsyncadd [#allocation6], %s34
      %s36 = sshll.u32 [#allocation5], 4
      %s37 = int_to_ptr.vmem [resolvable:$true] %s36
      %42 = dma.hbm_to_vmem [thread:$0]  %s1, 2048, %s37, [#allocation6], 128, 128, 8
    $region9: #{tpu_custom_call.1} parent=1 // pred_fallthru
      _
    // Predicated region
    $region10: #{tpu_custom_call.1} parent=1 // pred_check
      _
    $region11: #{tpu_custom_call.1} parent=1 // pred_check_branch
      %44 = sbr.rel (0) target = $region13
    $region12: #{tpu_custom_call.1} parent=1 // pred_region
      _
    $region13: #{tpu_custom_call.1} parent=1 // pred_fallthru
      _
    // Predicated region
    $region14: #{tpu_custom_call.1} parent=1 // pred_check
      _
    $region15: #{tpu_custom_call.1} parent=1 // pred_check_branch
      %46 = sbr.rel (0) target = $region17
    $region16: #{tpu_custom_call.1} parent=1 // pred_region
      %s48 = ssub.s32 4096, 4096
      %49 = vsyncadd [#allocation6], %s48
      %s50 = sshll.u32 [#allocation7], 4
      %s51 = int_to_ptr.vmem [resolvable:$true] %s50
      %56 = dma.hbm_to_vmem [thread:$0]  %s3, 4096, %s51, [#allocation6], 128, 128, 8
    $region17: #{tpu_custom_call.1} parent=1 // pred_fallthru
      _
    // Predicated region
    $region18: #{tpu_custom_call.1} parent=1 // pred_check
      _
    $region19: #{tpu_custom_call.1} parent=1 // pred_check_branch
      %58 = sbr.rel (0) target = $region21
    $region20: #{tpu_custom_call.1} parent=1 // pred_region
      _
    $region21: #{tpu_custom_call.1} parent=1 // pred_fallthru
      _
    // Predicated region
    $region22: #{tpu_custom_call.1} parent=1 // pred_check
      _
    $region23: #{tpu_custom_call.1} parent=1 // pred_check_branch
      %60 = sbr.rel (0) target = $region25
    $region24: #{tpu_custom_call.1} parent=1 // pred_region
      %s62 = ssub.s32 4096, 4096
      %63 = vsyncadd [#allocation9], %s62
      %s64 = sshll.u32 [#allocation8], 4
      %s65 = int_to_ptr.vmem [resolvable:$true] %s64
      %70 = dma.hbm_to_vmem [thread:$0]  %s5, 4096, %s65, [#allocation9], 128, 128, 8
    $region25: #{tpu_custom_call.1} parent=1 // pred_fallthru
      _
    // Predicated region
    $region26: #{tpu_custom_call.1} parent=1 // pred_check
      _
    $region27: #{tpu_custom_call.1} parent=1 // pred_check_branch
      %72 = sbr.rel (0) target = $region29
    $region28: #{tpu_custom_call.1} parent=1 // pred_region
      _
    $region29: #{tpu_custom_call.1} parent=1 // pred_fallthru
      _
    // Predicated region
    $region30: #{tpu_custom_call.1} parent=1 // pred_check
      _
    $region31: #{tpu_custom_call.1} parent=1 // pred_check_branch
      %74 = sbr.rel (0) target = $region33
    $region32: #{tpu_custom_call.1} parent=1 // pred_region
      %s76 = ssub.s32 4096, 4096
      %77 = vsyncadd [#allocation9], %s76
      %s78 = sshll.u32 [#allocation10], 4
      %s79 = int_to_ptr.vmem [resolvable:$true] %s78
      %84 = dma.hbm_to_vmem [thread:$0]  %s7, 4096, %s79, [#allocation9], 128, 128, 8
    $region33: #{tpu_custom_call.1} parent=1 // pred_fallthru
      _
    // Predicated region
    $region34: #{tpu_custom_call.1} parent=1 // pred_check
      _
    $region35: #{tpu_custom_call.1} parent=1 // pred_check_branch
      %86 = sbr.rel (0) target = $region37
    $region36: #{tpu_custom_call.1} parent=1 // pred_region
      _
    $region37: #{tpu_custom_call.1} parent=1 // pred_fallthru
      _
    // Predicated region
    $region38: #{tpu_custom_call.1} parent=1 // pred_check
      _
    $region39: #{tpu_custom_call.1} parent=1 // pred_check_branch
      %88 = sbr.rel (0) target = $region41
    $region40: #{tpu_custom_call.1} parent=1 // pred_region
      %s90 = ssub.s32 4096, 4096
      %91 = vsyncadd [#allocation12], %s90
      %s92 = sshll.u32 [#allocation11], 4
      %s93 = int_to_ptr.vmem [resolvable:$true] %s92
      %98 = dma.hbm_to_vmem [thread:$0]  %s9, 4096, %s93, [#allocation12], 64, 64, 4
    $region41: #{tpu_custom_call.1} parent=1 // pred_fallthru
      _
    // Predicated region
    $region42: #{tpu_custom_call.1} parent=1 // pred_check
      _
    $region43: #{tpu_custom_call.1} parent=1 // pred_check_branch
      %100 = sbr.rel (0) target = $region45
    $region44: #{tpu_custom_call.1} parent=1 // pred_region
      _
    $region45: #{tpu_custom_call.1} parent=1 // pred_fallthru
      _
    // Predicated region
    $region46: #{tpu_custom_call.1} parent=1 // pred_check
      _
    $region47: #{tpu_custom_call.1} parent=1 // pred_check_branch
      %102 = sbr.rel (0) target = $region49
    $region48: #{tpu_custom_call.1} parent=1 // pred_region
      %103 = dma.done [#allocation3], 192
    $region49: #{tpu_custom_call.1} parent=1 // pred_fallthru
      _
    // Predicated region
    $region50: #{tpu_custom_call.1} parent=1 // pred_check
      _
    $region51: #{tpu_custom_call.1} parent=1 // pred_check_branch
      %105 = sbr.rel (0) target = $region53
    $region52: #{tpu_custom_call.1} parent=1 // pred_region
      %106 = dma.done [#allocation6], 2048
    $region53: #{tpu_custom_call.1} parent=1 // pred_fallthru
      _
    // Predicated region
    $region54: #{tpu_custom_call.1} parent=1 // pred_check
      _
    $region55: #{tpu_custom_call.1} parent=1 // pred_check_branch
      %108 = sbr.rel (0) target = $region57
    $region56: #{tpu_custom_call.1} parent=1 // pred_region
      %109 = dma.done [#allocation6], 4096
    $region57: #{tpu_custom_call.1} parent=1 // pred_fallthru
      _
    // Predicated region
    $region58: #{tpu_custom_call.1} parent=1 // pred_check
      _
    $region59: #{tpu_custom_call.1} parent=1 // pred_check_branch
      %111 = sbr.rel (0) target = $region61
    $region60: #{tpu_custom_call.1} parent=1 // pred_region
      %112 = dma.done [#allocation9], 4096
    $region61: #{tpu_custom_call.1} parent=1 // pred_fallthru
      _
    // Predicated region
    $region62: #{tpu_custom_call.1} parent=1 // pred_check
      _
    $region63: #{tpu_custom_call.1} parent=1 // pred_check_branch
      %114 = sbr.rel (0) target = $region65
    $region64: #{tpu_custom_call.1} parent=1 // pred_region
      %115 = dma.done [#allocation9], 4096
    $region65: #{tpu_custom_call.1} parent=1 // pred_fallthru
      _
    // Predicated region
    $region66: #{tpu_custom_call.1} parent=1 // pred_check
      _
    $region67: #{tpu_custom_call.1} parent=1 // pred_check_branch
      %117 = sbr.rel (0) target = $region69
    $region68: #{tpu_custom_call.1} parent=1 // pred_region
      %118 = dma.done [#allocation12], 4096
    $region69: #{tpu_custom_call.1} parent=1 // pred_fallthru
      _
    %v120 = vld [vmem:[#allocation2] sm:$0xff]
    %v121 = vld [vmem:[#allocation2 + $0x8] sm:$0xf]
    %v122 = vld [vmem:[#allocation5] sm:$0xff]
    %v123 = vld [vmem:[#allocation5 + $0x8] sm:$0xff]
    %v124 = vld [vmem:[#allocation5 + $0x10] sm:$0xff]
    %v125 = vld [vmem:[#allocation5 + $0x18] sm:$0xff]
    %v126 = vld [vmem:[#allocation5 + $0x20] sm:$0xff]
    %v127 = vld [vmem:[#allocation5 + $0x28] sm:$0xff]
    %v128 = vld [vmem:[#allocation5 + $0x30] sm:$0xff]
    %v129 = vld [vmem:[#allocation5 + $0x38] sm:$0xff]
    %v130 = vld [vmem:[#allocation5 + $0x40] sm:$0xff]
    %v131 = vld [vmem:[#allocation5 + $0x48] sm:$0xff]
    %v132 = vld [vmem:[#allocation5 + $0x50] sm:$0xff]
    %v133 = vld [vmem:[#allocation5 + $0x58] sm:$0xff]
    %v134 = vld [vmem:[#allocation5 + $0x60] sm:$0xff]
    %v135 = vld [vmem:[#allocation5 + $0x68] sm:$0xff]
    %v136 = vld [vmem:[#allocation5 + $0x70] sm:$0xff]
    %v137 = vld [vmem:[#allocation5 + $0x78] sm:$0xff]
    %v138 = vld [vmem:[%s2] sm:$0x3]
    %v140 = vlaneseq
    %v141 = vshrl.u32 %v140, 7
    %v142 = vsub.s32 0, %v141
    %v143 = vrot.slane %v138, %v142
    %v144 = vlaneseq
    %v145 = vshrl.u32 %v144, 7
    %v146 = vsub.s32 1, %v145
    %v147 = vrot.slane %v138, %v146
    %v166 = vunpack.c.l.b16 %v122
    %v167 = vunpack.c.h.b16 %v122
    %v168 = vunpack.c.l.b16 %v123
    %v169 = vunpack.c.h.b16 %v123
    %v170 = vunpack.c.l.b16 %v124
    %v171 = vunpack.c.h.b16 %v124
    %v172 = vunpack.c.l.b16 %v125
    %v173 = vunpack.c.h.b16 %v125
    %v174 = vunpack.c.l.b16 %v126
    %v175 = vunpack.c.h.b16 %v126
    %v176 = vunpack.c.l.b16 %v127
    %v177 = vunpack.c.h.b16 %v127
    %v178 = vunpack.c.l.b16 %v128
    %v179 = vunpack.c.h.b16 %v128
    %v180 = vunpack.c.l.b16 %v129
    %v181 = vunpack.c.h.b16 %v129
    %v182 = vunpack.c.l.b16 %v130
    %v183 = vunpack.c.h.b16 %v130
    %v184 = vunpack.c.l.b16 %v131
    %v185 = vunpack.c.h.b16 %v131
    %v186 = vunpack.c.l.b16 %v132
    %v187 = vunpack.c.h.b16 %v132
    %v188 = vunpack.c.l.b16 %v133
    %v189 = vunpack.c.h.b16 %v133
    %v190 = vunpack.c.l.b16 %v134
    %v191 = vunpack.c.h.b16 %v134
    %v192 = vunpack.c.l.b16 %v135
    %v193 = vunpack.c.h.b16 %v135
    %v194 = vunpack.c.l.b16 %v136
    %v195 = vunpack.c.h.b16 %v136
    %v196 = vunpack.c.l.b16 %v137
    %v197 = vunpack.c.h.b16 %v137
    %v198 = vpack.c.b16 %v168, %v166
    %v199 = vpack.c.b16 %v169, %v167
    %v200 = vpack.c.b16 %v172, %v170
    %v201 = vpack.c.b16 %v173, %v171
    %v202 = vpack.c.b16 %v176, %v174
    %v203 = vpack.c.b16 %v177, %v175
    %v204 = vpack.c.b16 %v180, %v178
    %v205 = vpack.c.b16 %v181, %v179
    %v206 = vpack.c.b16 %v184, %v182
    %v207 = vpack.c.b16 %v185, %v183
    %v208 = vpack.c.b16 %v188, %v186
    %v209 = vpack.c.b16 %v189, %v187
    %v210 = vpack.c.b16 %v192, %v190
    %v211 = vpack.c.b16 %v193, %v191
    %v212 = vpack.c.b16 %v196, %v194
    %v213 = vpack.c.b16 %v197, %v195
    %230 = vmatprep.subr.bf16.mxu0 %v199
    %231 = vmatpush1.bf16.msra.mxu0 %v198
    %232 = vmatprep.subr.bf16.mxu0 %v201
    %233 = vmatpush1.bf16.msra.mxu0 %v200
    %234 = vmatprep.subr.bf16.mxu0 %v203
    %235 = vmatpush1.bf16.msra.mxu0 %v202
    %236 = vmatprep.subr.bf16.mxu0 %v205
    %237 = vmatpush1.bf16.msra.mxu0 %v204
    %238 = vmatprep.subr.bf16.mxu0 %v207
    %239 = vmatpush1.bf16.msra.mxu0 %v206
    %240 = vmatprep.subr.bf16.mxu0 %v209
    %241 = vmatpush1.bf16.msra.mxu0 %v208
    %242 = vmatprep.subr.bf16.mxu0 %v211
    %243 = vmatpush1.bf16.msra.mxu0 %v210
    %244 = vmatprep.subr.bf16.mxu0 %v213
    %245 = vmatpush1.bf16.msra.mxu0 %v212
    %246 = vmatprep.subr.bf16.mxu0 0
    %247 = vmatpush1.bf16.msra.mxu0 0
    %248 = vmatprep.subr.bf16.mxu0 0
    %249 = vmatpush1.bf16.msra.mxu0 0
    %250 = vmatprep.subr.bf16.mxu0 0
    %251 = vmatpush1.bf16.msra.mxu0 0
    %252 = vmatprep.subr.bf16.mxu0 0
    %253 = vmatpush1.bf16.msra.mxu0 0
    %254 = vmatprep.subr.bf16.mxu0 0
    %255 = vmatpush1.bf16.msra.mxu0 0
    %256 = vmatprep.subr.bf16.mxu0 0
    %257 = vmatpush1.bf16.msra.mxu0 0
    %258 = vmatprep.subr.bf16.mxu0 0
    %259 = vmatpush1.bf16.msra.mxu0 0
    %260 = vmatprep.subr.bf16.mxu0 0
    %261 = vmatpush1.bf16.msra.mxu0 0
    %262 = vmatprep.mubr.bf16.mxu0 0
    %263 = vmatmul.mubr.bf16.gmra.mrb[0].mxu0 %v120
    %v264 = vpop.f32.mrb[0].mxu0
    %v265 = vadd.f32 %v143, %v264
    %v266 = vpop.f32.mrb[0].mxu0
    %v267 = vadd.f32 %v147, %v266
    %v268 = vpop.f32.mrb[0].mxu0
    %v269 = vpop.f32.mrb[0].mxu0
    %270 = vdwg.mxu0
    %v271 = vmax.f32 %v265, 0.0
    %v272 = vmax.f32 %v267, 0.0
    %v273 = vpack.c.bf16 %v271, %v271
    %v274 = vpack.c.bf16 %v272, %v272
    %v275 = vld [vmem:[#allocation7] sm:$0xff]
    %v276 = vld [vmem:[#allocation7 + $0x8] sm:$0xff]
    %v277 = vld [vmem:[#allocation7 + $0x10] sm:$0xff]
    %v278 = vld [vmem:[#allocation7 + $0x18] sm:$0xff]
    %v279 = vld [vmem:[#allocation7 + $0x20] sm:$0xff]
    %v280 = vld [vmem:[#allocation7 + $0x28] sm:$0xff]
    %v281 = vld [vmem:[#allocation7 + $0x30] sm:$0xff]
    %v282 = vld [vmem:[#allocation7 + $0x38] sm:$0xff]
    %v283 = vld [vmem:[#allocation7 + $0x40] sm:$0xff]
    %v284 = vld [vmem:[#allocation7 + $0x48] sm:$0xff]
    %v285 = vld [vmem:[#allocation7 + $0x50] sm:$0xff]
    %v286 = vld [vmem:[#allocation7 + $0x58] sm:$0xff]
    %v287 = vld [vmem:[#allocation7 + $0x60] sm:$0xff]
    %v288 = vld [vmem:[#allocation7 + $0x68] sm:$0xff]
    %v289 = vld [vmem:[#allocation7 + $0x70] sm:$0xff]
    %v290 = vld [vmem:[#allocation7 + $0x78] sm:$0xff]
    %v291 = vld [vmem:[#allocation7 + $0x80] sm:$0xff]
    %v292 = vld [vmem:[#allocation7 + $0x88] sm:$0xff]
    %v293 = vld [vmem:[#allocation7 + $0x90] sm:$0xff]
    %v294 = vld [vmem:[#allocation7 + $0x98] sm:$0xff]
    %v295 = vld [vmem:[#allocation7 + $0xa0] sm:$0xff]
    %v296 = vld [vmem:[#allocation7 + $0xa8] sm:$0xff]
    %v297 = vld [vmem:[#allocation7 + $0xb0] sm:$0xff]
    %v298 = vld [vmem:[#allocation7 + $0xb8] sm:$0xff]
    %v299 = vld [vmem:[#allocation7 + $0xc0] sm:$0xff]
    %v300 = vld [vmem:[#allocation7 + $0xc8] sm:$0xff]
    %v301 = vld [vmem:[#allocation7 + $0xd0] sm:$0xff]
    %v302 = vld [vmem:[#allocation7 + $0xd8] sm:$0xff]
    %v303 = vld [vmem:[#allocation7 + $0xe0] sm:$0xff]
    %v304 = vld [vmem:[#allocation7 + $0xe8] sm:$0xff]
    %v305 = vld [vmem:[#allocation7 + $0xf0] sm:$0xff]
    %v306 = vld [vmem:[#allocation7 + $0xf8] sm:$0xff]
    %v307 = vld [vmem:[%s4] sm:$0x3]
    %v309 = vlaneseq
    %v310 = vshrl.u32 %v309, 7
    %v311 = vsub.s32 0, %v310
    %v312 = vrot.slane %v307, %v311
    %v313 = vlaneseq
    %v314 = vshrl.u32 %v313, 7
    %v315 = vsub.s32 1, %v314
    %v316 = vrot.slane %v307, %v315
    %v351 = vunpack.c.l.b16 %v275
    %v352 = vunpack.c.h.b16 %v275
    %v353 = vunpack.c.l.b16 %v276
    %v354 = vunpack.c.h.b16 %v276
    %v355 = vunpack.c.l.b16 %v277
    %v356 = vunpack.c.h.b16 %v277
    %v357 = vunpack.c.l.b16 %v278
    %v358 = vunpack.c.h.b16 %v278
    %v359 = vunpack.c.l.b16 %v279
    %v360 = vunpack.c.h.b16 %v279
    %v361 = vunpack.c.l.b16 %v280
    %v362 = vunpack.c.h.b16 %v280
    %v363 = vunpack.c.l.b16 %v281
    %v364 = vunpack.c.h.b16 %v281
    %v365 = vunpack.c.l.b16 %v282
    %v366 = vunpack.c.h.b16 %v282
    %v367 = vunpack.c.l.b16 %v283
    %v368 = vunpack.c.h.b16 %v283
    %v369 = vunpack.c.l.b16 %v284
    %v370 = vunpack.c.h.b16 %v284
    %v371 = vunpack.c.l.b16 %v285
    %v372 = vunpack.c.h.b16 %v285
    %v373 = vunpack.c.l.b16 %v286
    %v374 = vunpack.c.h.b16 %v286
    %v375 = vunpack.c.l.b16 %v287
    %v376 = vunpack.c.h.b16 %v287
    %v377 = vunpack.c.l.b16 %v288
    %v378 = vunpack.c.h.b16 %v288
    %v379 = vunpack.c.l.b16 %v289
    %v380 = vunpack.c.h.b16 %v289
    %v381 = vunpack.c.l.b16 %v290
    %v382 = vunpack.c.h.b16 %v290
    %v383 = vunpack.c.l.b16 %v291
    %v384 = vunpack.c.h.b16 %v291
    %v385 = vunpack.c.l.b16 %v292
    %v386 = vunpack.c.h.b16 %v292
    %v387 = vunpack.c.l.b16 %v293
    %v388 = vunpack.c.h.b16 %v293
    %v389 = vunpack.c.l.b16 %v294
    %v390 = vunpack.c.h.b16 %v294
    %v391 = vunpack.c.l.b16 %v295
    %v392 = vunpack.c.h.b16 %v295
    %v393 = vunpack.c.l.b16 %v296
    %v394 = vunpack.c.h.b16 %v296
    %v395 = vunpack.c.l.b16 %v297
    %v396 = vunpack.c.h.b16 %v297
    %v397 = vunpack.c.l.b16 %v298
    %v398 = vunpack.c.h.b16 %v298
    %v399 = vunpack.c.l.b16 %v299
    %v400 = vunpack.c.h.b16 %v299
    %v401 = vunpack.c.l.b16 %v300
    %v402 = vunpack.c.h.b16 %v300
    %v403 = vunpack.c.l.b16 %v301
    %v404 = vunpack.c.h.b16 %v301
    %v405 = vunpack.c.l.b16 %v302
    %v406 = vunpack.c.h.b16 %v302
    %v407 = vunpack.c.l.b16 %v303
    %v408 = vunpack.c.h.b16 %v303
    %v409 = vunpack.c.l.b16 %v304
    %v410 = vunpack.c.h.b16 %v304
    %v411 = vunpack.c.l.b16 %v305
    %v412 = vunpack.c.h.b16 %v305
    %v413 = vunpack.c.l.b16 %v306
    %v414 = vunpack.c.h.b16 %v306
    %v415 = vpack.c.b16 %v353, %v351
    %v416 = vpack.c.b16 %v354, %v352
    %v417 = vpack.c.b16 %v357, %v355
    %v418 = vpack.c.b16 %v358, %v356
    %v419 = vpack.c.b16 %v361, %v359
    %v420 = vpack.c.b16 %v362, %v360
    %v421 = vpack.c.b16 %v365, %v363
    %v422 = vpack.c.b16 %v366, %v364
    %v423 = vpack.c.b16 %v369, %v367
    %v424 = vpack.c.b16 %v370, %v368
    %v425 = vpack.c.b16 %v373, %v371
    %v426 = vpack.c.b16 %v374, %v372
    %v427 = vpack.c.b16 %v377, %v375
    %v428 = vpack.c.b16 %v378, %v376
    %v429 = vpack.c.b16 %v381, %v379
    %v430 = vpack.c.b16 %v382, %v380
    %v431 = vpack.c.b16 %v385, %v383
    %v432 = vpack.c.b16 %v386, %v384
    %v433 = vpack.c.b16 %v389, %v387
    %v434 = vpack.c.b16 %v390, %v388
    %v435 = vpack.c.b16 %v393, %v391
    %v436 = vpack.c.b16 %v394, %v392
    %v437 = vpack.c.b16 %v397, %v395
    %v438 = vpack.c.b16 %v398, %v396
    %v439 = vpack.c.b16 %v401, %v399
    %v440 = vpack.c.b16 %v402, %v400
    %v441 = vpack.c.b16 %v405, %v403
    %v442 = vpack.c.b16 %v406, %v404
    %v443 = vpack.c.b16 %v409, %v407
    %v444 = vpack.c.b16 %v410, %v408
    %v445 = vpack.c.b16 %v413, %v411
    %v446 = vpack.c.b16 %v414, %v412
    %479 = vmatprep.subr.bf16.mxu0 %v416
    %480 = vmatpush1.bf16.msra.mxu0 %v415
    %481 = vmatprep.subr.bf16.mxu0 %v418
    %482 = vmatpush1.bf16.msra.mxu0 %v417
    %483 = vmatprep.subr.bf16.mxu0 %v420
    %484 = vmatpush1.bf16.msra.mxu0 %v419
    %485 = vmatprep.subr.bf16.mxu0 %v422
    %486 = vmatpush1.bf16.msra.mxu0 %v421
    %487 = vmatprep.subr.bf16.mxu0 %v424
    %488 = vmatpush1.bf16.msra.mxu0 %v423
    %489 = vmatprep.subr.bf16.mxu0 %v426
    %490 = vmatpush1.bf16.msra.mxu0 %v425
    %491 = vmatprep.subr.bf16.mxu0 %v428
    %492 = vmatpush1.bf16.msra.mxu0 %v427
    %493 = vmatprep.subr.bf16.mxu0 %v430
    %494 = vmatpush1.bf16.msra.mxu0 %v429
    %495 = vmatprep.subr.bf16.mxu0 %v432
    %496 = vmatpush1.bf16.msra.mxu0 %v431
    %497 = vmatprep.subr.bf16.mxu0 %v434
    %498 = vmatpush1.bf16.msra.mxu0 %v433
    %499 = vmatprep.subr.bf16.mxu0 %v436
    %500 = vmatpush1.bf16.msra.mxu0 %v435
    %501 = vmatprep.subr.bf16.mxu0 %v438
    %502 = vmatpush1.bf16.msra.mxu0 %v437
    %503 = vmatprep.subr.bf16.mxu0 %v440
    %504 = vmatpush1.bf16.msra.mxu0 %v439
    %505 = vmatprep.subr.bf16.mxu0 %v442
    %506 = vmatpush1.bf16.msra.mxu0 %v441
    %507 = vmatprep.subr.bf16.mxu0 %v444
    %508 = vmatpush1.bf16.msra.mxu0 %v443
    %509 = vmatprep.subr.bf16.mxu0 %v446
    %510 = vmatpush1.bf16.msra.mxu0 %v445
    %511 = vmatprep.mubr.bf16.mxu0 %v274
    %512 = vmatmul.mubr.bf16.gmra.mrb[0].mxu0 %v273
    %v513 = vpop.f32.mrb[0].mxu0
    %v514 = vadd.f32 %v312, %v513
    %v515 = vpop.f32.mrb[0].mxu0
    %v516 = vadd.f32 %v316, %v515
    %v517 = vpop.f32.mrb[0].mxu0
    %v518 = vpop.f32.mrb[0].mxu0
    %519 = vdwg.mxu0
    %v520 = vmax.f32 %v514, 0.0
    %v521 = vmax.f32 %v516, 0.0
    %v522 = vpack.c.bf16 %v520, %v520
    %v523 = vpack.c.bf16 %v521, %v521
    %v524 = vld [vmem:[#allocation8] sm:$0xff]
    %v525 = vld [vmem:[#allocation8 + $0x8] sm:$0xff]
    %v526 = vld [vmem:[#allocation8 + $0x10] sm:$0xff]
    %v527 = vld [vmem:[#allocation8 + $0x18] sm:$0xff]
    %v528 = vld [vmem:[#allocation8 + $0x20] sm:$0xff]
    %v529 = vld [vmem:[#allocation8 + $0x28] sm:$0xff]
    %v530 = vld [vmem:[#allocation8 + $0x30] sm:$0xff]
    %v531 = vld [vmem:[#allocation8 + $0x38] sm:$0xff]
    %v532 = vld [vmem:[#allocation8 + $0x40] sm:$0xff]
    %v533 = vld [vmem:[#allocation8 + $0x48] sm:$0xff]
    %v534 = vld [vmem:[#allocation8 + $0x50] sm:$0xff]
    %v535 = vld [vmem:[#allocation8 + $0x58] sm:$0xff]
    %v536 = vld [vmem:[#allocation8 + $0x60] sm:$0xff]
    %v537 = vld [vmem:[#allocation8 + $0x68] sm:$0xff]
    %v538 = vld [vmem:[#allocation8 + $0x70] sm:$0xff]
    %v539 = vld [vmem:[#allocation8 + $0x78] sm:$0xff]
    %v540 = vld [vmem:[#allocation8 + $0x80] sm:$0xff]
    %v541 = vld [vmem:[#allocation8 + $0x88] sm:$0xff]
    %v542 = vld [vmem:[#allocation8 + $0x90] sm:$0xff]
    %v543 = vld [vmem:[#allocation8 + $0x98] sm:$0xff]
    %v544 = vld [vmem:[#allocation8 + $0xa0] sm:$0xff]
    %v545 = vld [vmem:[#allocation8 + $0xa8] sm:$0xff]
    %v546 = vld [vmem:[#allocation8 + $0xb0] sm:$0xff]
    %v547 = vld [vmem:[#allocation8 + $0xb8] sm:$0xff]
    %v548 = vld [vmem:[#allocation8 + $0xc0] sm:$0xff]
    %v549 = vld [vmem:[#allocation8 + $0xc8] sm:$0xff]
    %v550 = vld [vmem:[#allocation8 + $0xd0] sm:$0xff]
    %v551 = vld [vmem:[#allocation8 + $0xd8] sm:$0xff]
    %v552 = vld [vmem:[#allocation8 + $0xe0] sm:$0xff]
    %v553 = vld [vmem:[#allocation8 + $0xe8] sm:$0xff]
    %v554 = vld [vmem:[#allocation8 + $0xf0] sm:$0xff]
    %v555 = vld [vmem:[#allocation8 + $0xf8] sm:$0xff]
    %v556 = vld [vmem:[%s6] sm:$0x3]
    %v558 = vlaneseq
    %v559 = vshrl.u32 %v558, 7
    %v560 = vsub.s32 0, %v559
    %v561 = vrot.slane %v556, %v560
    %v562 = vlaneseq
    %v563 = vshrl.u32 %v562, 7
    %v564 = vsub.s32 1, %v563
    %v565 = vrot.slane %v556, %v564
    %v600 = vunpack.c.l.b16 %v524
    %v601 = vunpack.c.h.b16 %v524
    %v602 = vunpack.c.l.b16 %v525
    %v603 = vunpack.c.h.b16 %v525
    %v604 = vunpack.c.l.b16 %v526
    %v605 = vunpack.c.h.b16 %v526
    %v606 = vunpack.c.l.b16 %v527
    %v607 = vunpack.c.h.b16 %v527
    %v608 = vunpack.c.l.b16 %v528
    %v609 = vunpack.c.h.b16 %v528
    %v610 = vunpack.c.l.b16 %v529
    %v611 = vunpack.c.h.b16 %v529
    %v612 = vunpack.c.l.b16 %v530
    %v613 = vunpack.c.h.b16 %v530
    %v614 = vunpack.c.l.b16 %v531
    %v615 = vunpack.c.h.b16 %v531
    %v616 = vunpack.c.l.b16 %v532
    %v617 = vunpack.c.h.b16 %v532
    %v618 = vunpack.c.l.b16 %v533
    %v619 = vunpack.c.h.b16 %v533
    %v620 = vunpack.c.l.b16 %v534
    %v621 = vunpack.c.h.b16 %v534
    %v622 = vunpack.c.l.b16 %v535
    %v623 = vunpack.c.h.b16 %v535
    %v624 = vunpack.c.l.b16 %v536
    %v625 = vunpack.c.h.b16 %v536
    %v626 = vunpack.c.l.b16 %v537
    %v627 = vunpack.c.h.b16 %v537
    %v628 = vunpack.c.l.b16 %v538
    %v629 = vunpack.c.h.b16 %v538
    %v630 = vunpack.c.l.b16 %v539
    %v631 = vunpack.c.h.b16 %v539
    %v632 = vunpack.c.l.b16 %v540
    %v633 = vunpack.c.h.b16 %v540
    %v634 = vunpack.c.l.b16 %v541
    %v635 = vunpack.c.h.b16 %v541
    %v636 = vunpack.c.l.b16 %v542
    %v637 = vunpack.c.h.b16 %v542
    %v638 = vunpack.c.l.b16 %v543
    %v639 = vunpack.c.h.b16 %v543
    %v640 = vunpack.c.l.b16 %v544
    %v641 = vunpack.c.h.b16 %v544
    %v642 = vunpack.c.l.b16 %v545
    %v643 = vunpack.c.h.b16 %v545
    %v644 = vunpack.c.l.b16 %v546
    %v645 = vunpack.c.h.b16 %v546
    %v646 = vunpack.c.l.b16 %v547
    %v647 = vunpack.c.h.b16 %v547
    %v648 = vunpack.c.l.b16 %v548
    %v649 = vunpack.c.h.b16 %v548
    %v650 = vunpack.c.l.b16 %v549
    %v651 = vunpack.c.h.b16 %v549
    %v652 = vunpack.c.l.b16 %v550
    %v653 = vunpack.c.h.b16 %v550
    %v654 = vunpack.c.l.b16 %v551
    %v655 = vunpack.c.h.b16 %v551
    %v656 = vunpack.c.l.b16 %v552
    %v657 = vunpack.c.h.b16 %v552
    %v658 = vunpack.c.l.b16 %v553
    %v659 = vunpack.c.h.b16 %v553
    %v660 = vunpack.c.l.b16 %v554
    %v661 = vunpack.c.h.b16 %v554
    %v662 = vunpack.c.l.b16 %v555
    %v663 = vunpack.c.h.b16 %v555
    %v664 = vpack.c.b16 %v602, %v600
    %v665 = vpack.c.b16 %v603, %v601
    %v666 = vpack.c.b16 %v606, %v604
    %v667 = vpack.c.b16 %v607, %v605
    %v668 = vpack.c.b16 %v610, %v608
    %v669 = vpack.c.b16 %v611, %v609
    %v670 = vpack.c.b16 %v614, %v612
    %v671 = vpack.c.b16 %v615, %v613
    %v672 = vpack.c.b16 %v618, %v616
    %v673 = vpack.c.b16 %v619, %v617
    %v674 = vpack.c.b16 %v622, %v620
    %v675 = vpack.c.b16 %v623, %v621
    %v676 = vpack.c.b16 %v626, %v624
    %v677 = vpack.c.b16 %v627, %v625
    %v678 = vpack.c.b16 %v630, %v628
    %v679 = vpack.c.b16 %v631, %v629
    %v680 = vpack.c.b16 %v634, %v632
    %v681 = vpack.c.b16 %v635, %v633
    %v682 = vpack.c.b16 %v638, %v636
    %v683 = vpack.c.b16 %v639, %v637
    %v684 = vpack.c.b16 %v642, %v640
    %v685 = vpack.c.b16 %v643, %v641
    %v686 = vpack.c.b16 %v646, %v644
    %v687 = vpack.c.b16 %v647, %v645
    %v688 = vpack.c.b16 %v650, %v648
    %v689 = vpack.c.b16 %v651, %v649
    %v690 = vpack.c.b16 %v654, %v652
    %v691 = vpack.c.b16 %v655, %v653
    %v692 = vpack.c.b16 %v658, %v656
    %v693 = vpack.c.b16 %v659, %v657
    %v694 = vpack.c.b16 %v662, %v660
    %v695 = vpack.c.b16 %v663, %v661
    %728 = vmatprep.subr.bf16.mxu0 %v665
    %729 = vmatpush1.bf16.msra.mxu0 %v664
    %730 = vmatprep.subr.bf16.mxu0 %v667
    %731 = vmatpush1.bf16.msra.mxu0 %v666
    %732 = vmatprep.subr.bf16.mxu0 %v669
    %733 = vmatpush1.bf16.msra.mxu0 %v668
    %734 = vmatprep.subr.bf16.mxu0 %v671
    %735 = vmatpush1.bf16.msra.mxu0 %v670
    %736 = vmatprep.subr.bf16.mxu0 %v673
    %737 = vmatpush1.bf16.msra.mxu0 %v672
    %738 = vmatprep.subr.bf16.mxu0 %v675
    %739 = vmatpush1.bf16.msra.mxu0 %v674
    %740 = vmatprep.subr.bf16.mxu0 %v677
    %741 = vmatpush1.bf16.msra.mxu0 %v676
    %742 = vmatprep.subr.bf16.mxu0 %v679
    %743 = vmatpush1.bf16.msra.mxu0 %v678
    %744 = vmatprep.subr.bf16.mxu0 %v681
    %745 = vmatpush1.bf16.msra.mxu0 %v680
    %746 = vmatprep.subr.bf16.mxu0 %v683
    %747 = vmatpush1.bf16.msra.mxu0 %v682
    %748 = vmatprep.subr.bf16.mxu0 %v685
    %749 = vmatpush1.bf16.msra.mxu0 %v684
    %750 = vmatprep.subr.bf16.mxu0 %v687
    %751 = vmatpush1.bf16.msra.mxu0 %v686
    %752 = vmatprep.subr.bf16.mxu0 %v689
    %753 = vmatpush1.bf16.msra.mxu0 %v688
    %754 = vmatprep.subr.bf16.mxu0 %v691
    %755 = vmatpush1.bf16.msra.mxu0 %v690
    %756 = vmatprep.subr.bf16.mxu0 %v693
    %757 = vmatpush1.bf16.msra.mxu0 %v692
    %758 = vmatprep.subr.bf16.mxu0 %v695
    %759 = vmatpush1.bf16.msra.mxu0 %v694
    %760 = vmatprep.mubr.bf16.mxu0 %v523
    %761 = vmatmul.mubr.bf16.gmra.mrb[0].mxu0 %v522
    %v762 = vpop.f32.mrb[0].mxu0
    %v763 = vadd.f32 %v561, %v762
    %v764 = vpop.f32.mrb[0].mxu0
    %v765 = vadd.f32 %v565, %v764
    %v766 = vpop.f32.mrb[0].mxu0
    %v767 = vpop.f32.mrb[0].mxu0
    %768 = vdwg.mxu0
    %v769 = vmax.f32 %v763, 0.0
    %v770 = vmax.f32 %v765, 0.0
    %v771 = vpack.c.bf16 %v769, %v769
    %v772 = vpack.c.bf16 %v770, %v770
    %v773 = vld [vmem:[#allocation10] sm:$0xff]
    %v774 = vld [vmem:[#allocation10 + $0x8] sm:$0xff]
    %v775 = vld [vmem:[#allocation10 + $0x10] sm:$0xff]
    %v776 = vld [vmem:[#allocation10 + $0x18] sm:$0xff]
    %v777 = vld [vmem:[#allocation10 + $0x20] sm:$0xff]
    %v778 = vld [vmem:[#allocation10 + $0x28] sm:$0xff]
    %v779 = vld [vmem:[#allocation10 + $0x30] sm:$0xff]
    %v780 = vld [vmem:[#allocation10 + $0x38] sm:$0xff]
    %v781 = vld [vmem:[#allocation10 + $0x40] sm:$0xff]
    %v782 = vld [vmem:[#allocation10 + $0x48] sm:$0xff]
    %v783 = vld [vmem:[#allocation10 + $0x50] sm:$0xff]
    %v784 = vld [vmem:[#allocation10 + $0x58] sm:$0xff]
    %v785 = vld [vmem:[#allocation10 + $0x60] sm:$0xff]
    %v786 = vld [vmem:[#allocation10 + $0x68] sm:$0xff]
    %v787 = vld [vmem:[#allocation10 + $0x70] sm:$0xff]
    %v788 = vld [vmem:[#allocation10 + $0x78] sm:$0xff]
    %v789 = vld [vmem:[#allocation10 + $0x80] sm:$0xff]
    %v790 = vld [vmem:[#allocation10 + $0x88] sm:$0xff]
    %v791 = vld [vmem:[#allocation10 + $0x90] sm:$0xff]
    %v792 = vld [vmem:[#allocation10 + $0x98] sm:$0xff]
    %v793 = vld [vmem:[#allocation10 + $0xa0] sm:$0xff]
    %v794 = vld [vmem:[#allocation10 + $0xa8] sm:$0xff]
    %v795 = vld [vmem:[#allocation10 + $0xb0] sm:$0xff]
    %v796 = vld [vmem:[#allocation10 + $0xb8] sm:$0xff]
    %v797 = vld [vmem:[#allocation10 + $0xc0] sm:$0xff]
    %v798 = vld [vmem:[#allocation10 + $0xc8] sm:$0xff]
    %v799 = vld [vmem:[#allocation10 + $0xd0] sm:$0xff]
    %v800 = vld [vmem:[#allocation10 + $0xd8] sm:$0xff]
    %v801 = vld [vmem:[#allocation10 + $0xe0] sm:$0xff]
    %v802 = vld [vmem:[#allocation10 + $0xe8] sm:$0xff]
    %v803 = vld [vmem:[#allocation10 + $0xf0] sm:$0xff]
    %v804 = vld [vmem:[#allocation10 + $0xf8] sm:$0xff]
    %v805 = vld [vmem:[%s8] sm:$0x3]
    %v807 = vlaneseq
    %v808 = vshrl.u32 %v807, 7
    %v809 = vsub.s32 0, %v808
    %v810 = vrot.slane %v805, %v809
    %v811 = vlaneseq
    %v812 = vshrl.u32 %v811, 7
    %v813 = vsub.s32 1, %v812
    %v814 = vrot.slane %v805, %v813
    %v849 = vunpack.c.l.b16 %v773
    %v850 = vunpack.c.h.b16 %v773
    %v851 = vunpack.c.l.b16 %v774
    %v852 = vunpack.c.h.b16 %v774
    %v853 = vunpack.c.l.b16 %v775
    %v854 = vunpack.c.h.b16 %v775
    %v855 = vunpack.c.l.b16 %v776
    %v856 = vunpack.c.h.b16 %v776
    %v857 = vunpack.c.l.b16 %v777
    %v858 = vunpack.c.h.b16 %v777
    %v859 = vunpack.c.l.b16 %v778
    %v860 = vunpack.c.h.b16 %v778
    %v861 = vunpack.c.l.b16 %v779
    %v862 = vunpack.c.h.b16 %v779
    %v863 = vunpack.c.l.b16 %v780
    %v864 = vunpack.c.h.b16 %v780
    %v865 = vunpack.c.l.b16 %v781
    %v866 = vunpack.c.h.b16 %v781
    %v867 = vunpack.c.l.b16 %v782
    %v868 = vunpack.c.h.b16 %v782
    %v869 = vunpack.c.l.b16 %v783
    %v870 = vunpack.c.h.b16 %v783
    %v871 = vunpack.c.l.b16 %v784
    %v872 = vunpack.c.h.b16 %v784
    %v873 = vunpack.c.l.b16 %v785
    %v874 = vunpack.c.h.b16 %v785
    %v875 = vunpack.c.l.b16 %v786
    %v876 = vunpack.c.h.b16 %v786
    %v877 = vunpack.c.l.b16 %v787
    %v878 = vunpack.c.h.b16 %v787
    %v879 = vunpack.c.l.b16 %v788
    %v880 = vunpack.c.h.b16 %v788
    %v881 = vunpack.c.l.b16 %v789
    %v882 = vunpack.c.h.b16 %v789
    %v883 = vunpack.c.l.b16 %v790
    %v884 = vunpack.c.h.b16 %v790
    %v885 = vunpack.c.l.b16 %v791
    %v886 = vunpack.c.h.b16 %v791
    %v887 = vunpack.c.l.b16 %v792
    %v888 = vunpack.c.h.b16 %v792
    %v889 = vunpack.c.l.b16 %v793
    %v890 = vunpack.c.h.b16 %v793
    %v891 = vunpack.c.l.b16 %v794
    %v892 = vunpack.c.h.b16 %v794
    %v893 = vunpack.c.l.b16 %v795
    %v894 = vunpack.c.h.b16 %v795
    %v895 = vunpack.c.l.b16 %v796
    %v896 = vunpack.c.h.b16 %v796
    %v897 = vunpack.c.l.b16 %v797
    %v898 = vunpack.c.h.b16 %v797
    %v899 = vunpack.c.l.b16 %v798
    %v900 = vunpack.c.h.b16 %v798
    %v901 = vunpack.c.l.b16 %v799
    %v902 = vunpack.c.h.b16 %v799
    %v903 = vunpack.c.l.b16 %v800
    %v904 = vunpack.c.h.b16 %v800
    %v905 = vunpack.c.l.b16 %v801
    %v906 = vunpack.c.h.b16 %v801
    %v907 = vunpack.c.l.b16 %v802
    %v908 = vunpack.c.h.b16 %v802
    %v909 = vunpack.c.l.b16 %v803
    %v910 = vunpack.c.h.b16 %v803
    %v911 = vunpack.c.l.b16 %v804
    %v912 = vunpack.c.h.b16 %v804
    %v913 = vpack.c.b16 %v851, %v849
    %v914 = vpack.c.b16 %v852, %v850
    %v915 = vpack.c.b16 %v855, %v853
    %v916 = vpack.c.b16 %v856, %v854
    %v917 = vpack.c.b16 %v859, %v857
    %v918 = vpack.c.b16 %v860, %v858
    %v919 = vpack.c.b16 %v863, %v861
    %v920 = vpack.c.b16 %v864, %v862
    %v921 = vpack.c.b16 %v867, %v865
    %v922 = vpack.c.b16 %v868, %v866
    %v923 = vpack.c.b16 %v871, %v869
    %v924 = vpack.c.b16 %v872, %v870
    %v925 = vpack.c.b16 %v875, %v873
    %v926 = vpack.c.b16 %v876, %v874
    %v927 = vpack.c.b16 %v879, %v877
    %v928 = vpack.c.b16 %v880, %v878
    %v929 = vpack.c.b16 %v883, %v881
    %v930 = vpack.c.b16 %v884, %v882
    %v931 = vpack.c.b16 %v887, %v885
    %v932 = vpack.c.b16 %v888, %v886
    %v933 = vpack.c.b16 %v891, %v889
    %v934 = vpack.c.b16 %v892, %v890
    %v935 = vpack.c.b16 %v895, %v893
    %v936 = vpack.c.b16 %v896, %v894
    %v937 = vpack.c.b16 %v899, %v897
    %v938 = vpack.c.b16 %v900, %v898
    %v939 = vpack.c.b16 %v903, %v901
    %v940 = vpack.c.b16 %v904, %v902
    %v941 = vpack.c.b16 %v907, %v905
    %v942 = vpack.c.b16 %v908, %v906
    %v943 = vpack.c.b16 %v911, %v909
    %v944 = vpack.c.b16 %v912, %v910
    %977 = vmatprep.subr.bf16.mxu0 %v914
    %978 = vmatpush1.bf16.msra.mxu0 %v913
    %979 = vmatprep.subr.bf16.mxu0 %v916
    %980 = vmatpush1.bf16.msra.mxu0 %v915
    %981 = vmatprep.subr.bf16.mxu0 %v918
    %982 = vmatpush1.bf16.msra.mxu0 %v917
    %983 = vmatprep.subr.bf16.mxu0 %v920
    %984 = vmatpush1.bf16.msra.mxu0 %v919
    %985 = vmatprep.subr.bf16.mxu0 %v922
    %986 = vmatpush1.bf16.msra.mxu0 %v921
    %987 = vmatprep.subr.bf16.mxu0 %v924
    %988 = vmatpush1.bf16.msra.mxu0 %v923
    %989 = vmatprep.subr.bf16.mxu0 %v926
    %990 = vmatpush1.bf16.msra.mxu0 %v925
    %991 = vmatprep.subr.bf16.mxu0 %v928
    %992 = vmatpush1.bf16.msra.mxu0 %v927
    %993 = vmatprep.subr.bf16.mxu0 %v930
    %994 = vmatpush1.bf16.msra.mxu0 %v929
    %995 = vmatprep.subr.bf16.mxu0 %v932
    %996 = vmatpush1.bf16.msra.mxu0 %v931
    %997 = vmatprep.subr.bf16.mxu0 %v934
    %998 = vmatpush1.bf16.msra.mxu0 %v933
    %999 = vmatprep.subr.bf16.mxu0 %v936
    %1000 = vmatpush1.bf16.msra.mxu0 %v935
    %1001 = vmatprep.subr.bf16.mxu0 %v938
    %1002 = vmatpush1.bf16.msra.mxu0 %v937
    %1003 = vmatprep.subr.bf16.mxu0 %v940
    %1004 = vmatpush1.bf16.msra.mxu0 %v939
    %1005 = vmatprep.subr.bf16.mxu0 %v942
    %1006 = vmatpush1.bf16.msra.mxu0 %v941
    %1007 = vmatprep.subr.bf16.mxu0 %v944
    %1008 = vmatpush1.bf16.msra.mxu0 %v943
    %1009 = vmatprep.mubr.bf16.mxu0 %v772
    %1010 = vmatmul.mubr.bf16.gmra.mrb[0].mxu0 %v771
    %v1011 = vpop.f32.mrb[0].mxu0
    %v1012 = vadd.f32 %v810, %v1011
    %v1013 = vpop.f32.mrb[0].mxu0
    %v1014 = vadd.f32 %v814, %v1013
    %v1015 = vpop.f32.mrb[0].mxu0
    %v1016 = vpop.f32.mrb[0].mxu0
    %1017 = vdwg.mxu0
    %v1018 = vmax.f32 %v1012, 0.0
    %v1019 = vmax.f32 %v1014, 0.0
    %v1020 = vpack.c.bf16 %v1018, %v1018
    %v1021 = vpack.c.bf16 %v1019, %v1019
    %v1024 = vunpack.c.h.b16 %v120
    %v1025 = vunpack.c.l.b16 %v121
    %v1026 = vpack.c.b16 %v1024, %v1024
    %v1027 = vpack.c.b16 %v1025, %v1025
    %v1030 = vld [vmem:[#allocation11] sm:$0xf]
    %v1031 = vld [vmem:[#allocation11 + $0x4] sm:$0xf]
    %v1032 = vld [vmem:[#allocation11 + $0x8] sm:$0xf]
    %v1033 = vld [vmem:[#allocation11 + $0xc] sm:$0xf]
    %v1034 = vld [vmem:[#allocation11 + $0x10] sm:$0xf]
    %v1035 = vld [vmem:[#allocation11 + $0x14] sm:$0xf]
    %v1036 = vld [vmem:[#allocation11 + $0x18] sm:$0xf]
    %v1037 = vld [vmem:[#allocation11 + $0x1c] sm:$0xf]
    %v1038 = vld [vmem:[#allocation11 + $0x20] sm:$0xf]
    %v1039 = vld [vmem:[#allocation11 + $0x24] sm:$0xf]
    %v1040 = vld [vmem:[#allocation11 + $0x28] sm:$0xf]
    %v1041 = vld [vmem:[#allocation11 + $0x2c] sm:$0xf]
    %v1042 = vld [vmem:[#allocation11 + $0x30] sm:$0xf]
    %v1043 = vld [vmem:[#allocation11 + $0x34] sm:$0xf]
    %v1044 = vld [vmem:[#allocation11 + $0x38] sm:$0xf]
    %v1045 = vld [vmem:[#allocation11 + $0x3c] sm:$0xf]
    %v1046 = vld [vmem:[#allocation11 + $0x40] sm:$0xf]
    %v1047 = vld [vmem:[#allocation11 + $0x44] sm:$0xf]
    %v1048 = vld [vmem:[#allocation11 + $0x48] sm:$0xf]
    %v1049 = vld [vmem:[#allocation11 + $0x4c] sm:$0xf]
    %v1050 = vld [vmem:[#allocation11 + $0x50] sm:$0xf]
    %v1051 = vld [vmem:[#allocation11 + $0x54] sm:$0xf]
    %v1052 = vld [vmem:[#allocation11 + $0x58] sm:$0xf]
    %v1053 = vld [vmem:[#allocation11 + $0x5c] sm:$0xf]
    %v1054 = vld [vmem:[#allocation11 + $0x60] sm:$0xf]
    %v1055 = vld [vmem:[#allocation11 + $0x64] sm:$0xf]
    %v1056 = vld [vmem:[#allocation11 + $0x68] sm:$0xf]
    %v1057 = vld [vmem:[#allocation11 + $0x6c] sm:$0xf]
    %v1058 = vld [vmem:[#allocation11 + $0x70] sm:$0xf]
    %v1059 = vld [vmem:[#allocation11 + $0x74] sm:$0xf]
    %v1060 = vld [vmem:[#allocation11 + $0x78] sm:$0xf]
    %v1061 = vld [vmem:[#allocation11 + $0x7c] sm:$0xf]
    %v1062 = vld [vmem:[#allocation11 + $0x80] sm:$0xf]
    %v1063 = vld [vmem:[#allocation11 + $0x84] sm:$0xf]
    %v1064 = vld [vmem:[#allocation11 + $0x88] sm:$0xf]
    %v1065 = vld [vmem:[#allocation11 + $0x8c] sm:$0xf]
    %v1066 = vld [vmem:[#allocation11 + $0x90] sm:$0xf]
    %v1067 = vld [vmem:[#allocation11 + $0x94] sm:$0xf]
    %v1068 = vld [vmem:[#allocation11 + $0x98] sm:$0xf]
    %v1069 = vld [vmem:[#allocation11 + $0x9c] sm:$0xf]
    %v1070 = vld [vmem:[#allocation11 + $0xa0] sm:$0xf]
    %v1071 = vld [vmem:[#allocation11 + $0xa4] sm:$0xf]
    %v1072 = vld [vmem:[#allocation11 + $0xa8] sm:$0xf]
    %v1073 = vld [vmem:[#allocation11 + $0xac] sm:$0xf]
    %v1074 = vld [vmem:[#allocation11 + $0xb0] sm:$0xf]
    %v1075 = vld [vmem:[#allocation11 + $0xb4] sm:$0xf]
    %v1076 = vld [vmem:[#allocation11 + $0xb8] sm:$0xf]
    %v1077 = vld [vmem:[#allocation11 + $0xbc] sm:$0xf]
    %v1078 = vld [vmem:[#allocation11 + $0xc0] sm:$0xf]
    %v1079 = vld [vmem:[#allocation11 + $0xc4] sm:$0xf]
    %v1080 = vld [vmem:[#allocation11 + $0xc8] sm:$0xf]
    %v1081 = vld [vmem:[#allocation11 + $0xcc] sm:$0xf]
    %v1082 = vld [vmem:[#allocation11 + $0xd0] sm:$0xf]
    %v1083 = vld [vmem:[#allocation11 + $0xd4] sm:$0xf]
    %v1084 = vld [vmem:[#allocation11 + $0xd8] sm:$0xf]
    %v1085 = vld [vmem:[#allocation11 + $0xdc] sm:$0xf]
    %v1086 = vld [vmem:[#allocation11 + $0xe0] sm:$0xf]
    %v1087 = vld [vmem:[#allocation11 + $0xe4] sm:$0xf]
    %v1088 = vld [vmem:[#allocation11 + $0xe8] sm:$0xf]
    %v1089 = vld [vmem:[#allocation11 + $0xec] sm:$0xf]
    %v1090 = vld [vmem:[#allocation11 + $0xf0] sm:$0xf]
    %v1091 = vld [vmem:[#allocation11 + $0xf4] sm:$0xf]
    %v1092 = vld [vmem:[#allocation11 + $0xf8] sm:$0xf]
    %v1093 = vld [vmem:[#allocation11 + $0xfc] sm:$0xf]
    %v1094 = vld [vmem:[%s10] sm:$0x1]
    %v1096 = vlaneseq
    %v1097 = vshrl.u32 %v1096, 7
    %v1098 = vsub.s32 0, %v1097
    %v1099 = vrot.slane %v1094, %v1098
    %v1165 = vunpack.c.l.b16 %v1030
    %v1166 = vunpack.c.l.b16 %v1031
    %v1167 = vunpack.c.l.b16 %v1032
    %v1168 = vunpack.c.l.b16 %v1033
    %v1169 = vunpack.c.l.b16 %v1034
    %v1170 = vunpack.c.l.b16 %v1035
    %v1171 = vunpack.c.l.b16 %v1036
    %v1172 = vunpack.c.l.b16 %v1037
    %v1173 = vunpack.c.l.b16 %v1038
    %v1174 = vunpack.c.l.b16 %v1039
    %v1175 = vunpack.c.l.b16 %v1040
    %v1176 = vunpack.c.l.b16 %v1041
    %v1177 = vunpack.c.l.b16 %v1042
    %v1178 = vunpack.c.l.b16 %v1043
    %v1179 = vunpack.c.l.b16 %v1044
    %v1180 = vunpack.c.l.b16 %v1045
    %v1181 = vunpack.c.l.b16 %v1046
    %v1182 = vunpack.c.l.b16 %v1047
    %v1183 = vunpack.c.l.b16 %v1048
    %v1184 = vunpack.c.l.b16 %v1049
    %v1185 = vunpack.c.l.b16 %v1050
    %v1186 = vunpack.c.l.b16 %v1051
    %v1187 = vunpack.c.l.b16 %v1052
    %v1188 = vunpack.c.l.b16 %v1053
    %v1189 = vunpack.c.l.b16 %v1054
    %v1190 = vunpack.c.l.b16 %v1055
    %v1191 = vunpack.c.l.b16 %v1056
    %v1192 = vunpack.c.l.b16 %v1057
    %v1193 = vunpack.c.l.b16 %v1058
    %v1194 = vunpack.c.l.b16 %v1059
    %v1195 = vunpack.c.l.b16 %v1060
    %v1196 = vunpack.c.l.b16 %v1061
    %v1197 = vunpack.c.l.b16 %v1062
    %v1198 = vunpack.c.l.b16 %v1063
    %v1199 = vunpack.c.l.b16 %v1064
    %v1200 = vunpack.c.l.b16 %v1065
    %v1201 = vunpack.c.l.b16 %v1066
    %v1202 = vunpack.c.l.b16 %v1067
    %v1203 = vunpack.c.l.b16 %v1068
    %v1204 = vunpack.c.l.b16 %v1069
    %v1205 = vunpack.c.l.b16 %v1070
    %v1206 = vunpack.c.l.b16 %v1071
    %v1207 = vunpack.c.l.b16 %v1072
    %v1208 = vunpack.c.l.b16 %v1073
    %v1209 = vunpack.c.l.b16 %v1074
    %v1210 = vunpack.c.l.b16 %v1075
    %v1211 = vunpack.c.l.b16 %v1076
    %v1212 = vunpack.c.l.b16 %v1077
    %v1213 = vunpack.c.l.b16 %v1078
    %v1214 = vunpack.c.l.b16 %v1079
    %v1215 = vunpack.c.l.b16 %v1080
    %v1216 = vunpack.c.l.b16 %v1081
    %v1217 = vunpack.c.l.b16 %v1082
    %v1218 = vunpack.c.l.b16 %v1083
    %v1219 = vunpack.c.l.b16 %v1084
    %v1220 = vunpack.c.l.b16 %v1085
    %v1221 = vunpack.c.l.b16 %v1086
    %v1222 = vunpack.c.l.b16 %v1087
    %v1223 = vunpack.c.l.b16 %v1088
    %v1224 = vunpack.c.l.b16 %v1089
    %v1225 = vunpack.c.l.b16 %v1090
    %v1226 = vunpack.c.l.b16 %v1091
    %v1227 = vunpack.c.l.b16 %v1092
    %v1228 = vunpack.c.l.b16 %v1093
    %v1229 = vpack.c.b16 %v1166, %v1165
    %v1230 = vpack.c.b16 %v1168, %v1167
    %v1231 = vpack.c.b16 %v1170, %v1169
    %v1232 = vpack.c.b16 %v1172, %v1171
    %v1233 = vpack.c.b16 %v1174, %v1173
    %v1234 = vpack.c.b16 %v1176, %v1175
    %v1235 = vpack.c.b16 %v1178, %v1177
    %v1236 = vpack.c.b16 %v1180, %v1179
    %v1237 = vpack.c.b16 %v1182, %v1181
    %v1238 = vpack.c.b16 %v1184, %v1183
    %v1239 = vpack.c.b16 %v1186, %v1185
    %v1240 = vpack.c.b16 %v1188, %v1187
    %v1241 = vpack.c.b16 %v1190, %v1189
    %v1242 = vpack.c.b16 %v1192, %v1191
    %v1243 = vpack.c.b16 %v1194, %v1193
    %v1244 = vpack.c.b16 %v1196, %v1195
    %v1245 = vpack.c.b16 %v1198, %v1197
    %v1246 = vpack.c.b16 %v1200, %v1199
    %v1247 = vpack.c.b16 %v1202, %v1201
    %v1248 = vpack.c.b16 %v1204, %v1203
    %v1249 = vpack.c.b16 %v1206, %v1205
    %v1250 = vpack.c.b16 %v1208, %v1207
    %v1251 = vpack.c.b16 %v1210, %v1209
    %v1252 = vpack.c.b16 %v1212, %v1211
    %v1253 = vpack.c.b16 %v1214, %v1213
    %v1254 = vpack.c.b16 %v1216, %v1215
    %v1255 = vpack.c.b16 %v1218, %v1217
    %v1256 = vpack.c.b16 %v1220, %v1219
    %v1257 = vpack.c.b16 %v1222, %v1221
    %v1258 = vpack.c.b16 %v1224, %v1223
    %v1259 = vpack.c.b16 %v1226, %v1225
    %v1260 = vpack.c.b16 %v1228, %v1227
    %1293 = vmatprep.subr.bf16.mxu0 0
    %1294 = vmatpush1.bf16.msra.mxu0 %v1229
    %1295 = vmatprep.subr.bf16.mxu0 0
    %1296 = vmatpush1.bf16.msra.mxu0 %v1230
    %1297 = vmatprep.subr.bf16.mxu0 0
    %1298 = vmatpush1.bf16.msra.mxu0 %v1231
    %1299 = vmatprep.subr.bf16.mxu0 0
    %1300 = vmatpush1.bf16.msra.mxu0 %v1232
    %1301 = vmatprep.subr.bf16.mxu0 0
    %1302 = vmatpush1.bf16.msra.mxu0 %v1233
    %1303 = vmatprep.subr.bf16.mxu0 0
    %1304 = vmatpush1.bf16.msra.mxu0 %v1234
    %1305 = vmatprep.subr.bf16.mxu0 0
    %1306 = vmatpush1.bf16.msra.mxu0 %v1235
    %1307 = vmatprep.subr.bf16.mxu0 0
    %1308 = vmatpush1.bf16.msra.mxu0 %v1236
    %1309 = vmatprep.subr.bf16.mxu0 0
    %1310 = vmatpush1.bf16.msra.mxu0 %v1237
    %1311 = vmatprep.subr.bf16.mxu0 0
    %1312 = vmatpush1.bf16.msra.mxu0 %v1238
    %1313 = vmatprep.subr.bf16.mxu0 0
    %1314 = vmatpush1.bf16.msra.mxu0 %v1239
    %1315 = vmatprep.subr.bf16.mxu0 0
    %1316 = vmatpush1.bf16.msra.mxu0 %v1240
    %1317 = vmatprep.subr.bf16.mxu0 0
    %1318 = vmatpush1.bf16.msra.mxu0 %v1241
    %1319 = vmatprep.subr.bf16.mxu0 0
    %1320 = vmatpush1.bf16.msra.mxu0 %v1242
    %1321 = vmatprep.subr.bf16.mxu0 0
    %1322 = vmatpush1.bf16.msra.mxu0 %v1243
    %1323 = vmatprep.subr.bf16.mxu0 0
    %1324 = vmatpush1.bf16.msra.mxu0 %v1244
    %1325 = vmatprep.mubr.bf16.mxu0 %v1021
    %1326 = vmatmul.mubr.bf16.gmra.mrb[0].mxu0 %v1020
    %v1327 = vpop.f32.mrb[0].mxu0
    %v1328 = vadd.f32 %v1099, %v1327
    %v1329 = vpop.f32.mrb[0].mxu0
    %v1330 = vpop.f32.mrb[0].mxu0
    %v1331 = vpop.f32.mrb[0].mxu0
    %1332 = vdwg.mxu0
    %1333 = vmatprep.subr.bf16.mxu0 0
    %1334 = vmatpush1.bf16.msra.mxu0 %v1245
    %1335 = vmatprep.subr.bf16.mxu0 0
    %1336 = vmatpush1.bf16.msra.mxu0 %v1246
    %1337 = vmatprep.subr.bf16.mxu0 0
    %1338 = vmatpush1.bf16.msra.mxu0 %v1247
    %1339 = vmatprep.subr.bf16.mxu0 0
    %1340 = vmatpush1.bf16.msra.mxu0 %v1248
    %1341 = vmatprep.subr.bf16.mxu0 0
    %1342 = vmatpush1.bf16.msra.mxu0 %v1249
    %1343 = vmatprep.subr.bf16.mxu0 0
    %1344 = vmatpush1.bf16.msra.mxu0 %v1250
    %1345 = vmatprep.subr.bf16.mxu0 0
    %1346 = vmatpush1.bf16.msra.mxu0 %v1251
    %1347 = vmatprep.subr.bf16.mxu0 0
    %1348 = vmatpush1.bf16.msra.mxu0 %v1252
    %1349 = vmatprep.subr.bf16.mxu0 0
    %1350 = vmatpush1.bf16.msra.mxu0 %v1253
    %1351 = vmatprep.subr.bf16.mxu0 0
    %1352 = vmatpush1.bf16.msra.mxu0 %v1254
    %1353 = vmatprep.subr.bf16.mxu0 0
    %1354 = vmatpush1.bf16.msra.mxu0 %v1255
    %1355 = vmatprep.subr.bf16.mxu0 0
    %1356 = vmatpush1.bf16.msra.mxu0 %v1256
    %1357 = vmatprep.subr.bf16.mxu0 0
    %1358 = vmatpush1.bf16.msra.mxu0 %v1257
    %1359 = vmatprep.subr.bf16.mxu0 0
    %1360 = vmatpush1.bf16.msra.mxu0 %v1258
    %1361 = vmatprep.subr.bf16.mxu0 0
    %1362 = vmatpush1.bf16.msra.mxu0 %v1259
    %1363 = vmatprep.subr.bf16.mxu0 0
    %1364 = vmatpush1.bf16.msra.mxu0 %v1260
    %1365 = vmatprep.mubr.bf16.mxu0 %v1027
    %1366 = vmatmul.mubr.bf16.gmra.mrb[0].mxu0 %v1026
    %v1367 = vpop.f32.mrb[0].mxu0
    %v1368 = vadd.f32 %v1328, %v1367
    %v1369 = vpop.f32.mrb[0].mxu0
    %v1370 = vpop.f32.mrb[0].mxu0
    %v1371 = vpop.f32.mrb[0].mxu0
    %1372 = vdwg.mxu0
    %1373 = vst [vmem:[#allocation13] sm:$0xff] %v1368
    // Predicated region
    $region70: #{tpu_custom_call.1} parent=1 // pred_check
      _
    $region71: #{tpu_custom_call.1} parent=1 // pred_check_branch
      %1375 = sbr.rel (0) target = $region73
    $region72: #{tpu_custom_call.1} parent=1 // pred_region
      %s1377 = ssub.s32 128, 128
      %1378 = vsyncadd [#allocation4], %s1377
      %s1380 = sshll.u32 [#allocation13], 4
      %s1381 = int_to_ptr.vmem [resolvable:$true] %s1380
      %1383 = dma.vmem_to_hbm [thread:$0]  %s1381, 128, %s11, [#allocation4]
    $region73: #{tpu_custom_call.1} parent=1 // pred_fallthru
      _
    // Predicated region
    $region74: #{tpu_custom_call.1} parent=1 // pred_check
      _
    $region75: #{tpu_custom_call.1} parent=1 // pred_check_branch
      %1385 = sbr.rel (0) target = $region77
    $region76: #{tpu_custom_call.1} parent=1 // pred_region
      %1386 = dma.done [#allocation4], 128
    $region77: #{tpu_custom_call.1} parent=1 // pred_fallthru
      _
    %1387 = vsyncpa [#allocation3], 1
    %1388 = vsyncpa [#allocation6], 1
    %1389 = vsyncpa [#allocation9], 1
    %1390 = vsyncpa [#allocation12], 1
    %1391 = vsyncpa [#allocation4], 1

</llo_original>
